<compile_context>
chip_gen: v7x
topology: tpu7x:2x2x1
jax: 0.10.0
libtpu: 0.0.40
codegen_flags: <defaults>
</compile_context>

<pallas_src>
import numpy as np
import jax
import jax.numpy as jnp
from jax import lax
from jax.experimental import pallas as pl
from jax.experimental.pallas import tpu as pltpu


def _round_up(x, m):
    return (x + m - 1) // m * m


def cross_entropy_loss_mean(scores, target, lengths):
    """Pallas implementation of CrossEntropyLoss_mean.forward."""
    B, L, C = scores.shape
    Cp = _round_up(C, 128)          # lane-dense class axis
    Lp = _round_up(L, 8)            # sublane-dense time axis

    # --- batch tile: keep double-buffered scores tiles well under scoped VMEM
    itemsize = np.dtype(scores.dtype).itemsize
    bytes_per_row = Lp * Cp * itemsize
    budget = 12 * 1024 * 1024
    TB = max(1, min(B, budget // max(1, 2 * bytes_per_row)))
    if TB < B:
        TB = max(8, TB // 8 * 8)    # sublane-aligned target/length blocks when tiling
    Bp = _round_up(B, TB)
    nb = Bp // TB

    # --- pad to dense shapes (padded positions never reach the loss)
    scores_p = jnp.pad(scores, ((0, Bp - B), (0, Lp - L), (0, 0)))
    scores_p = jnp.pad(scores_p, ((0, 0), (0, 0), (0, Cp - C)),
                       constant_values=-1e30)        # masked out of the softmax
    target_p = jnp.pad(target.astype(jnp.int32), ((0, Bp - B), (0, Lp - L)))
    lengths_i = lengths.astype(jnp.int32)
    len_bcast = jnp.broadcast_to(
        jnp.pad(lengths_i, (0, Bp - B))[:, None], (Bp, Lp)).astype(jnp.int32)

    # --- closed-form EMA: props[:,t] = 0.5*0.3^t + sum_{k<t} 0.7*0.3^(t-1-k)*e[:,k]
    t_idx = np.arange(Lp)
    base_np = (0.5 * 0.3 ** t_idx).astype(np.float32).reshape(1, Lp)
    A_np = np.zeros((Lp, Lp), np.float32)
    for tt in range(1, Lp):
        for k in range(tt):
            A_np[k, tt] = 0.7 * 0.3 ** (tt - 1 - k)
    A = jnp.asarray(A_np)
    base = jnp.asarray(base_np)

    def kernel(scores_ref, target_ref, len_ref, A_ref, base_ref, out_ref):
        x = scores_ref[...].astype(jnp.float32)               # (TB, Lp, Cp)

        # log-softmax statistics over classes (lane axis) — single pass
        m = jnp.max(x, axis=2, keepdims=True)                  # (TB, Lp, 1)
        ex = jnp.exp(x - m)
        s = jnp.sum(ex, axis=2, keepdims=True)                  # (TB, Lp, 1)
        lse = jnp.log(s) + m                                     # (TB, Lp, 1)

        # gather target logit and its exp with one shared one-hot mask
        tgt = target_ref[...]                                    # (TB, Lp) int32
        col = lax.broadcasted_iota(jnp.int32, (TB, Lp, Cp), 2)
        onehot = col == tgt[:, :, None]
        x_t = jnp.sum(jnp.where(onehot, x, 0.0), axis=2, keepdims=True)
        ex_t = jnp.sum(jnp.where(onehot, ex, 0.0), axis=2, keepdims=True)
        logp_t = (x_t - lse)[:, :, 0]                            # (TB, Lp)
        e = (ex_t / s)[:, :, 0]                                  # == exp(logp_t)

        # EMA recurrence as one small matmul (MXU is otherwise idle)
        props = base_ref[...] + jnp.dot(e, A_ref[...],
                                        preferred_element_type=jnp.float32)

        # length-masked softmax over valid timesteps (lane axis), scaled by length
        len_i = len_ref[...]                                     # (TB, Lp) int32
        tpos = lax.broadcasted_iota(jnp.int32, (TB, Lp), 1)
        valid = tpos < len_i
        pm = jnp.where(valid, props, jnp.float32(-1e30))
        mx = jnp.max(pm, axis=1, keepdims=True)
        exw = jnp.where(valid, jnp.exp(pm - mx), 0.0)
        denom = jnp.maximum(jnp.sum(exw, axis=1, keepdims=True), 1e-30)  # 0-len guard
        w = exw / denom * len_i.astype(jnp.float32)              # (TB, Lp)

        # per-block partial sum, splatted into a lane-dense output tile
        contrib = jnp.sum(jnp.where(valid, logp_t * w, 0.0))
        out_ref[...] = jnp.broadcast_to(contrib, out_ref.shape)

    partials = pl.pallas_call(
        kernel,
        out_shape=jax.ShapeDtypeStruct((nb, 8, 128), jnp.float32),
        grid_spec=pltpu.PrefetchScalarGridSpec(
            num_scalar_prefetch=0,
            grid=(nb,),
            in_specs=[
                pl.BlockSpec((TB, Lp, Cp), lambda b: (b, 0, 0)),   # scores
                pl.BlockSpec((TB, Lp), lambda b: (b, 0)),           # targets
                pl.BlockSpec((TB, Lp), lambda b: (b, 0)),           # lengths (broadcast)
                pl.BlockSpec((Lp, Lp), lambda b: (0, 0)),           # EMA matrix (resident)
                pl.BlockSpec((1, Lp), lambda b: (0, 0)),            # EMA base   (resident)
            ],
            out_specs=pl.BlockSpec((1, 8, 128), lambda b: (b, 0, 0)),
        ),
        compiler_params=pltpu.CompilerParams(
            dimension_semantics=("parallel",)),
    )(scores_p, target_p, len_bcast, A, base)

    total = jnp.sum(lengths_i).astype(jnp.float32)
    return -jnp.sum(partials[:, 0, 0]) / total


def _reference_loss(scores, target, lengths):
    """Pure-numpy reference (mirrors the PyTorch forward exactly)."""
    scores = np.asarray(scores, np.float32)
    target = np.asarray(target)
    lengths = [int(v) for v in np.asarray(lengths)]
    B, L, C = scores.shape
    xs = scores - scores.max(axis=-1, keepdims=True)
    logp = xs - np.log(np.exp(xs).sum(axis=-1, keepdims=True))
    logp_t = np.take_along_axis(logp, target[..., None], axis=-1)[..., 0]
    e = np.exp(logp_t)
    props = np.zeros((B, L), np.float32)
    for t in range(L):
        props[:, t] = 0.5 if t == 0 else 0.3 * props[:, t - 1] + 0.7 * e[:, t - 1]
    total = 0.0
    for b in range(B):
        lb = lengths[b]
        p = props[b, :lb]
        sm = np.exp(p - p.max())
        w = sm / sm.sum() * lb
        total += float(np.sum(logp_t[b, :lb] * w))
    return -total / float(sum(lengths))


if __name__ == "__main__":
    key = jax.random.PRNGKey(0)
    B, L, C = 2, 8, 16                             # batch=2, max seq len=8, classes=16
    lengths = jnp.array([8, 5], dtype=jnp.int32)   # sorted descending (packed-seq convention)
    k1, k2 = jax.random.split(key)
    scores = jax.random.normal(k1, (B, L, C), dtype=jnp.float32)
    target = jax.random.randint(k2, (B, L), 0, C, dtype=jnp.int32)

    loss = cross_entropy_loss_mean(scores, target, lengths)
    loss = jax.block_until_ready(loss)

    ref = _reference_loss(np.array(scores), np.array(target), np.array(lengths))
    assert abs(float(loss) - ref) < 1e-4, (float(loss), ref)
    print("KERNEL_OK")
</pallas_src>

<mosaic_0001>
module attributes {stable_mosaic.version = 11 : i64} {
  func.func @kernel(%arg0: i32, %arg1: memref<2x8x128xf32, #tpu.memory_space<vmem>>, %arg2: memref<2x8xi32, #tpu.memory_space<vmem>>, %arg3: memref<2x8xi32, #tpu.memory_space<vmem>>, %arg4: memref<8x8xf32, #tpu.memory_space<vmem>>, %arg5: memref<1x8xf32, #tpu.memory_space<vmem>>, %arg6: memref<1x8x128xf32, #tpu.memory_space<vmem>>) attributes {dimension_semantics = [#tpu.dimension_semantics<parallel>], iteration_bounds = array<i64: 1>, scalar_prefetch = 0 : i64, scratch_operands = 0 : i64, tpu.core_type = #tpu.core_type<tc>, window_params = [{transform_indices = @transform_0, window_bounds = array<i64: 2, 8, 128>}, {transform_indices = @transform_1, window_bounds = array<i64: 2, 8>}, {transform_indices = @transform_2, window_bounds = array<i64: 2, 8>}, {pipeline_mode = #tpu.pipeline_mode<synchronous>, transform_indices = @transform_3, window_bounds = array<i64: 8, 8>}, {pipeline_mode = #tpu.pipeline_mode<synchronous>, transform_indices = @transform_4, window_bounds = array<i64: 1, 8>}, {transform_indices = @transform_5, window_bounds = array<i64: 1, 8, 128>}]} {
    %c0 = arith.constant 0 : index
    %c0_0 = arith.constant 0 : index
    %c0_1 = arith.constant 0 : index
    %0 = vector.load %arg1[%c0, %c0_0, %c0_1] : memref<2x8x128xf32, #tpu.memory_space<vmem>>, vector<2x8x128xf32>
    %cst = arith.constant dense<0xFF800000> : vector<2x8xf32>
    %1 = vector.multi_reduction <maximumf>, %0, %cst [2] : vector<2x8x128xf32> to vector<2x8xf32>
    %2 = vector.shape_cast %1 : vector<2x8xf32> to vector<2x8x1xf32>
    %3 = vector.broadcast %2 : vector<2x8x1xf32> to vector<2x8x128xf32>
    %4 = arith.subf %0, %3 : vector<2x8x128xf32>
    %5 = math.exp %4 : vector<2x8x128xf32>
    %cst_2 = arith.constant dense<0.000000e+00> : vector<2x8xf32>
    %6 = vector.multi_reduction <add>, %5, %cst_2 [2] : vector<2x8x128xf32> to vector<2x8xf32>
    %7 = vector.shape_cast %6 : vector<2x8xf32> to vector<2x8x1xf32>
    %8 = math.log %7 : vector<2x8x1xf32>
    %9 = arith.addf %8, %2 : vector<2x8x1xf32>
    %c0_3 = arith.constant 0 : index
    %c0_4 = arith.constant 0 : index
    %10 = vector.load %arg2[%c0_3, %c0_4] : memref<2x8xi32, #tpu.memory_space<vmem>>, vector<2x8xi32>
    %11 = tpu.iota {dimensions = array<i32: 2>} : vector<2x8x128xi32>
    %12 = vector.shape_cast %10 : vector<2x8xi32> to vector<2x8x1xi32>
    %13 = vector.broadcast %12 : vector<2x8x1xi32> to vector<2x8x128xi32>
    %14 = arith.cmpi eq, %11, %13 : vector<2x8x128xi32>
    %cst_5 = arith.constant 0.000000e+00 : f32
    %15 = vector.broadcast %cst_5 : f32 to vector<2x8x128xf32>
    %16 = arith.select %14, %0, %15 : vector<2x8x128xi1>, vector<2x8x128xf32>
    %cst_6 = arith.constant dense<0.000000e+00> : vector<2x8xf32>
    %17 = vector.multi_reduction <add>, %16, %cst_6 [2] : vector<2x8x128xf32> to vector<2x8xf32>
    %18 = vector.shape_cast %17 : vector<2x8xf32> to vector<2x8x1xf32>
    %cst_7 = arith.constant 0.000000e+00 : f32
    %19 = vector.broadcast %cst_7 : f32 to vector<2x8x128xf32>
    %20 = arith.select %14, %5, %19 : vector<2x8x128xi1>, vector<2x8x128xf32>
    %cst_8 = arith.constant dense<0.000000e+00> : vector<2x8xf32>
    %21 = vector.multi_reduction <add>, %20, %cst_8 [2] : vector<2x8x128xf32> to vector<2x8xf32>
    %22 = vector.shape_cast %21 : vector<2x8xf32> to vector<2x8x1xf32>
    %23 = arith.subf %18, %9 : vector<2x8x1xf32>
    %24 = vector.shape_cast %23 : vector<2x8x1xf32> to vector<2x8xf32>
    %25 = arith.divf %22, %7 : vector<2x8x1xf32>
    %26 = vector.shape_cast %25 : vector<2x8x1xf32> to vector<2x8xf32>
    %c0_9 = arith.constant 0 : index
    %c0_10 = arith.constant 0 : index
    %27 = vector.load %arg5[%c0_9, %c0_10] : memref<1x8xf32, #tpu.memory_space<vmem>>, vector<1x8xf32>
    %c0_11 = arith.constant 0 : index
    %c0_12 = arith.constant 0 : index
    %28 = vector.load %arg4[%c0_11, %c0_12] : memref<8x8xf32, #tpu.memory_space<vmem>>, vector<8x8xf32>
    %cst_13 = arith.constant dense<0.000000e+00> : vector<2x8xf32>
    %29 = tpu.matmul %26, %28, %cst_13 {dimension_numbers = #tpu.dot_dimension_numbers<[1], [0], [0], [1], [0, 0, 1, 1], [], []>} : vector<2x8xf32>, vector<8x8xf32>, vector<2x8xf32> -> vector<2x8xf32>
    %30 = vector.broadcast %27 : vector<1x8xf32> to vector<2x8xf32>
    %31 = arith.addf %30, %29 : vector<2x8xf32>
    %c0_14 = arith.constant 0 : index
    %c0_15 = arith.constant 0 : index
    %32 = vector.load %arg3[%c0_14, %c0_15] : memref<2x8xi32, #tpu.memory_space<vmem>>, vector<2x8xi32>
    %33 = tpu.iota {dimensions = array<i32: 1>} : vector<2x8xi32>
    %34 = arith.cmpi slt, %33, %32 : vector<2x8xi32>
    %cst_16 = arith.constant -1.000000e+30 : f32
    %35 = vector.broadcast %cst_16 : f32 to vector<2x8xf32>
    %36 = arith.select %34, %31, %35 : vector<2x8xi1>, vector<2x8xf32>
    %cst_17 = arith.constant dense<0xFF800000> : vector<2xf32>
    %37 = vector.multi_reduction <maximumf>, %36, %cst_17 [1] : vector<2x8xf32> to vector<2xf32>
    %38 = vector.shape_cast %37 : vector<2xf32> to vector<2x1xf32>
    %39 = vector.broadcast %38 : vector<2x1xf32> to vector<2x8xf32>
    %40 = arith.subf %36, %39 : vector<2x8xf32>
    %41 = math.exp %40 : vector<2x8xf32>
    %cst_18 = arith.constant 0.000000e+00 : f32
    %42 = vector.broadcast %cst_18 : f32 to vector<2x8xf32>
    %43 = arith.select %34, %41, %42 : vector<2x8xi1>, vector<2x8xf32>
    %cst_19 = arith.constant dense<0.000000e+00> : vector<2xf32>
    %44 = vector.multi_reduction <add>, %43, %cst_19 [1] : vector<2x8xf32> to vector<2xf32>
    %45 = vector.shape_cast %44 : vector<2xf32> to vector<2x1xf32>
    %cst_20 = arith.constant 1.000000e-30 : f32
    %46 = vector.broadcast %cst_20 : f32 to vector<2x1xf32>
    %47 = arith.maximumf %45, %46 : vector<2x1xf32>
    %48 = vector.broadcast %47 : vector<2x1xf32> to vector<2x8xf32>
    %49 = arith.divf %43, %48 : vector<2x8xf32>
    %50 = arith.sitofp %32 : vector<2x8xi32> to vector<2x8xf32>
    %51 = arith.mulf %49, %50 : vector<2x8xf32>
    %52 = arith.mulf %24, %51 : vector<2x8xf32>
    %cst_21 = arith.constant 0.000000e+00 : f32
    %53 = vector.broadcast %cst_21 : f32 to vector<2x8xf32>
    %54 = arith.select %34, %52, %53 : vector<2x8xi1>, vector<2x8xf32>
    %55 = vector.shape_cast %54 : vector<2x8xf32> to vector<1x2x8xf32>
    %cst_22 = arith.constant dense<0.000000e+00> : vector<1xf32>
    %56 = vector.multi_reduction <add>, %55, %cst_22 [1, 2] : vector<1x2x8xf32> to vector<1xf32>
    %57 = vector.shape_cast %56 : vector<1xf32> to vector<1x1x1xf32>
    %58 = vector.extract %57[0, 0, 0] : f32 from vector<1x1x1xf32>
    %59 = vector.broadcast %58 : f32 to vector<1x8x128xf32>
    %c0_23 = arith.constant 0 : index
    %c0_24 = arith.constant 0 : index
    %c0_25 = arith.constant 0 : index
    %60 = vector.load %arg6[%c0_23, %c0_24, %c0_25] : memref<1x8x128xf32, #tpu.memory_space<vmem>>, vector<1x8x128xf32>
    tpu.vector_store %arg6[%c0_23, %c0_24, %c0_25], %59 {strides = array<i32>} : memref<1x8x128xf32, #tpu.memory_space<vmem>>, vector<1x8x128xf32>,
    return
  }
  func.func @transform_0(%arg0: i32) -> (i32, i32, i32) {
    %c0_i32 = arith.constant 0 : i32
    %c0_i32_0 = arith.constant 0 : i32
    %c0_i32_1 = arith.constant 0 : i32
    return %arg0, %c0_i32, %c0_i32_0 : i32, i32, i32
  }
  func.func @transform_1(%arg0: i32) -> (i32, i32) {
    %c0_i32 = arith.constant 0 : i32
    %c0_i32_0 = arith.constant 0 : i32
    return %arg0, %c0_i32 : i32, i32
  }
  func.func @transform_2(%arg0: i32) -> (i32, i32) {
    %c0_i32 = arith.constant 0 : i32
    %c0_i32_0 = arith.constant 0 : i32
    return %arg0, %c0_i32 : i32, i32
  }
  func.func @transform_3(%arg0: i32) -> (i32, i32) {
    %c0_i32 = arith.constant 0 : i32
    %c0_i32_0 = arith.constant 0 : i32
    %c0_i32_1 = arith.constant 0 : i32
    return %c0_i32, %c0_i32_0 : i32, i32
  }
  func.func @transform_4(%arg0: i32) -> (i32, i32) {
    %c0_i32 = arith.constant 0 : i32
    %c0_i32_0 = arith.constant 0 : i32
    %c0_i32_1 = arith.constant 0 : i32
    return %c0_i32, %c0_i32_0 : i32, i32
  }
  func.func @transform_5(%arg0: i32) -> (i32, i32, i32) {
    %c0_i32 = arith.constant 0 : i32
    %c0_i32_0 = arith.constant 0 : i32
    %c0_i32_1 = arith.constant 0 : i32
    return %arg0, %c0_i32, %c0_i32_0 : i32, i32, i32
  }
}

</mosaic_0001>

<llo_original>
// kernel: tpu_custom_call.1
$region0: #{tpu_custom_call.1}
  #allocation0 [shape = 'u32[]', space=smem, size = 0x4, offset = 0x4, fixed_abs, tag = 'smem constant byte address 0x4 - core index']
  #allocation1 [shape = 'u32[144,128]{1,0:T(1,128)}', space=vmem, size = 0x12000, scoped, tag = 'internal scratch']
  %s0 = inlined_call_operand.hbm [shape: f32[2,8,128], index: 0, kind: input, shape index: {}]
  %s1 = inlined_call_operand.vmem [shape: s32[2,8], index: 1, kind: input, shape index: {}]
  %s2 = inlined_call_operand.hbm [shape: s32[2,8], index: 2, kind: input, shape index: {}]
  %s3 = inlined_call_operand.vmem [shape: f32[8,8], index: 3, kind: input, shape index: {}]
  %s4 = inlined_call_operand.vmem [shape: f32[1,8], index: 4, kind: input, shape index: {}]
  %s5 = inlined_call_operand.hbm [shape: f32[1,8,128], index: 5, kind: output, shape index: {}]
  %s6 = sld [smem:[#allocation0]]
  $region38: #{tpu_custom_call.1} parent=0
    _
  %s8 = ssub.s32 1, %s6
  %s9 = scalar_select 0, %s8, %s6
  $region1: #{tpu_custom_call.1} parent=0
    #allocation2 [shape = 'u8[8192]{0}', space=vmem, size = 0x2000, scoped, tag = 'input window, operand 0, single buffered']
    #allocation3 [shape = 's32[1]{0}', space=sflag, size = 0x4, scoped, tag = 'scoped memory for tpu_custom_call.1']
    #allocation4 [shape = 's32[1]{0}', space=sflag, size = 0x4, scoped, tag = 'scoped memory for tpu_custom_call.1']
    #allocation5 [shape = 'u8[1024]{0}', space=vmem, size = 0x400, scoped, tag = 'input window, operand 2, single buffered']
    #allocation6 [shape = 's32[1]{0}', space=sflag, size = 0x4, scoped, tag = 'scoped memory for tpu_custom_call.1']
    #allocation7 [shape = 'u8[4096]{0}', space=vmem, size = 0x1000, scoped, tag = 'output window, operand 0, single buffered']
    %10 = vsyncpa [#allocation3], 0
    %11 = vsyncpa [#allocation6], 0
    %12 = vsyncpa [#allocation4], 0
    // Predicated region
    $region2: #{tpu_custom_call.1} parent=1 // pred_check
      _
    $region3: #{tpu_custom_call.1} parent=1 // pred_check_branch
      %14 = sbr.rel (0) target = $region5
    $region4: #{tpu_custom_call.1} parent=1 // pred_region
      %s16 = ssub.s32 256, 256
      %17 = vsyncadd [#allocation3], %s16
      %s18 = sshll.u32 [#allocation2], 4
      %s19 = int_to_ptr.vmem [resolvable:$true] %s18
      %24 = dma.hbm_to_vmem [thread:$0]  %s0, 256, %s19, [#allocation3], 128, 128, 8
    $region5: #{tpu_custom_call.1} parent=1 // pred_fallthru
      _
    // Predicated region
    $region6: #{tpu_custom_call.1} parent=1 // pred_check
      _
    $region7: #{tpu_custom_call.1} parent=1 // pred_check_branch
      %26 = sbr.rel (0) target = $region9
    $region8: #{tpu_custom_call.1} parent=1 // pred_region
      _
    $region9: #{tpu_custom_call.1} parent=1 // pred_fallthru
      _
    // Predicated region
    $region10: #{tpu_custom_call.1} parent=1 // pred_check
      _
    $region11: #{tpu_custom_call.1} parent=1 // pred_check_branch
      %28 = sbr.rel (0) target = $region13
    $region12: #{tpu_custom_call.1} parent=1 // pred_region
      %s30 = ssub.s32 32, 32
      %31 = vsyncadd [#allocation6], %s30
      %s33 = sshll.u32 [#allocation5], 4
      %s34 = int_to_ptr.vmem [resolvable:$true] %s33
      %36 = dma.hbm_to_vmem [thread:$0]  %s2, 32, %s34, [#allocation6]
    $region13: #{tpu_custom_call.1} parent=1 // pred_fallthru
      _
    // Predicated region
    $region14: #{tpu_custom_call.1} parent=1 // pred_check
      _
    $region15: #{tpu_custom_call.1} parent=1 // pred_check_branch
      %38 = sbr.rel (0) target = $region17
    $region16: #{tpu_custom_call.1} parent=1 // pred_region
      _
    $region17: #{tpu_custom_call.1} parent=1 // pred_fallthru
      _
    // Predicated region
    $region18: #{tpu_custom_call.1} parent=1 // pred_check
      _
    $region19: #{tpu_custom_call.1} parent=1 // pred_check_branch
      %40 = sbr.rel (0) target = $region21
    $region20: #{tpu_custom_call.1} parent=1 // pred_region
      _
    $region21: #{tpu_custom_call.1} parent=1 // pred_fallthru
      _
    // Predicated region
    $region22: #{tpu_custom_call.1} parent=1 // pred_check
      _
    $region23: #{tpu_custom_call.1} parent=1 // pred_check_branch
      %42 = sbr.rel (0) target = $region25
    $region24: #{tpu_custom_call.1} parent=1 // pred_region
      %43 = dma.done [#allocation3], 256
    $region25: #{tpu_custom_call.1} parent=1 // pred_fallthru
      _
    // Predicated region
    $region26: #{tpu_custom_call.1} parent=1 // pred_check
      _
    $region27: #{tpu_custom_call.1} parent=1 // pred_check_branch
      %45 = sbr.rel (0) target = $region29
    $region28: #{tpu_custom_call.1} parent=1 // pred_region
      %46 = dma.done [#allocation6], 32
    $region29: #{tpu_custom_call.1} parent=1 // pred_fallthru
      _
    %v47 = vld [vmem:[#allocation2] sm:$0xff]
    %v48 = vld [vmem:[#allocation2 + $0x8] sm:$0xff]
    %49 = vmax.xlane.f32.xlu0 %v47
    %v50 = vpop.xlane.xlu0 %49
    %51 = vmax.xlane.f32.xlu0 %v48
    %v52 = vpop.xlane.xlu0 %51
    %v53 = vsub.f32 %v47, %v50
    %v54 = vsub.f32 %v48, %v52
    %v55 = vmul.f32 %v53, 1.442695
    %v56 = vpow.pop %v55
    %v57 = vmul.f32 %v54, 1.442695
    %v58 = vpow.pop %v57
    %59 = vadd.xlane.f32.xlu0 %v56
    %v60 = vpop.xlane.xlu0 %59
    %61 = vadd.xlane.f32.xlu0 %v58
    %v62 = vpop.xlane.xlu0 %61
    %v63 = vlog2.pop %v60
    %v64 = vmul.f32 %v63, 0.6931472
    %v65 = vlog2.pop %v62
    %v66 = vmul.f32 %v65, 0.6931472
    %v67 = vadd.f32 %v64, %v50
    %v68 = vadd.f32 %v66, %v52
    %v69 = vld [vmem:[%s1] sm:$0x3]
    %v70 = vlaneseq
    %v71 = vand.u32 %v70, 127
    %v72 = vlaneseq
    %v73 = vshrl.u32 %v72, 7
    %v74 = vsub.s32 0, %v73
    %v75 = vrot.slane %v69, %v74
    %77 = vbcast.lane.b32.xlu0 %v75, 256
    %v78 = vpop.permute.xlu0 %77
    %v79 = vlaneseq
    %v80 = vshrl.u32 %v79, 7
    %v81 = vsub.s32 1, %v80
    %v82 = vrot.slane %v69, %v81
    %84 = vbcast.lane.b32.xlu0 %v82, 256
    %v85 = vpop.permute.xlu0 %84
    %vm86 = vcmp.eq.s32.totalorder %v71, %v78
    %vm87 = vcmp.eq.s32.totalorder %v71, %v85
    %v88 = vsel %vm86, %v47, 0.0
    %v89 = vsel %vm87, %v48, 0.0
    %90 = vadd.xlane.f32.xlu0 %v88
    %v91 = vpop.xlane.xlu0 %90
    %92 = vadd.xlane.f32.xlu0 %v89
    %v93 = vpop.xlane.xlu0 %92
    %v94 = vsel %vm86, %v56, 0.0
    %v95 = vsel %vm87, %v58, 0.0
    %96 = vadd.xlane.f32.xlu0 %v94
    %v97 = vpop.xlane.xlu0 %96
    %98 = vadd.xlane.f32.xlu0 %v95
    %v99 = vpop.xlane.xlu0 %98
    %v100 = vsub.f32 %v91, %v67
    %v101 = vsub.f32 %v93, %v68
    %v102 = vrcp.pop %v60
    %v103 = vmul.f32 %v97, %v102
    %v104 = vrcp.pop %v62
    %v105 = vmul.f32 %v99, %v104
    %v106 = vld [vmem:[%s4] sm:$0x1]
    %v107 = vld [vmem:[%s3] sm:$0xff]
    %v110 = vlaneseq
    %v111 = vshrl.u32 %v110, 7
    %v112 = vsub.s32 %v71, %v111
    %v113 = vrot.slane %v103, %v112
    %v114 = vlaneseq
    %v115 = vshrl.u32 %v114, 7
    %v116 = vsub.s32 %v71, %v115
    %v117 = vrot.slane %v105, %v116
    %vm118 = vcmask 1041409
    %v119 = vsel %vm118, %v117, %v113
    %vm120 = vcmask 64512
    %v121 = vsel %vm120, %v119, 0
    %123 = vmatprep.subr.mxu0 0.0
    %124 = vmatpush1.msra.mxu0 %v107
    %125 = vmatprep.subr.mxu0 0.0
    %126 = vmatpush1.msra.mxu0 0.0
    %127 = vmatprep.subr.mxu0 0.0
    %128 = vmatpush1.msra.mxu0 0.0
    %129 = vmatprep.subr.mxu0 0.0
    %130 = vmatpush1.msra.mxu0 0.0
    %131 = vmatprep.subr.mxu0 0.0
    %132 = vmatpush1.msra.mxu0 0.0
    %133 = vmatprep.subr.mxu0 0.0
    %134 = vmatpush1.msra.mxu0 0.0
    %135 = vmatprep.subr.mxu0 0.0
    %136 = vmatpush1.msra.mxu0 0.0
    %137 = vmatprep.subr.mxu0 0.0
    %138 = vmatpush1.msra.mxu0 0.0
    %139 = vmatprep.subr.mxu0 0.0
    %140 = vmatpush1.msra.mxu0 0.0
    %141 = vmatprep.subr.mxu0 0.0
    %142 = vmatpush1.msra.mxu0 0.0
    %143 = vmatprep.subr.mxu0 0.0
    %144 = vmatpush1.msra.mxu0 0.0
    %145 = vmatprep.subr.mxu0 0.0
    %146 = vmatpush1.msra.mxu0 0.0
    %147 = vmatprep.subr.mxu0 0.0
    %148 = vmatpush1.msra.mxu0 0.0
    %149 = vmatprep.subr.mxu0 0.0
    %150 = vmatpush1.msra.mxu0 0.0
    %151 = vmatprep.subr.mxu0 0.0
    %152 = vmatpush1.msra.mxu0 0.0
    %153 = vmatprep.subr.mxu0 0.0
    %154 = vmatpush1.msra.mxu0 0.0
    %155 = vmatprep.subr.mxu0 0.0
    %156 = vmatpush1.msra.mxu0 0.0
    %157 = vmatprep.subr.mxu0 0.0
    %158 = vmatpush1.msra.mxu0 0.0
    %159 = vmatprep.subr.mxu0 0.0
    %160 = vmatpush1.msra.mxu0 0.0
    %161 = vmatprep.subr.mxu0 0.0
    %162 = vmatpush1.msra.mxu0 0.0
    %163 = vmatprep.subr.mxu0 0.0
    %164 = vmatpush1.msra.mxu0 0.0
    %165 = vmatprep.subr.mxu0 0.0
    %166 = vmatpush1.msra.mxu0 0.0
    %167 = vmatprep.subr.mxu0 0.0
    %168 = vmatpush1.msra.mxu0 0.0
    %169 = vmatprep.subr.mxu0 0.0
    %170 = vmatpush1.msra.mxu0 0.0
    %171 = vmatprep.subr.mxu0 0.0
    %172 = vmatpush1.msra.mxu0 0.0
    %173 = vmatprep.subr.mxu0 0.0
    %174 = vmatpush1.msra.mxu0 0.0
    %175 = vmatprep.subr.mxu0 0.0
    %176 = vmatpush1.msra.mxu0 0.0
    %177 = vmatprep.subr.mxu0 0.0
    %178 = vmatpush1.msra.mxu0 0.0
    %179 = vmatprep.subr.mxu0 0.0
    %180 = vmatpush1.msra.mxu0 0.0
    %181 = vmatprep.subr.mxu0 0.0
    %182 = vmatpush1.msra.mxu0 0.0
    %183 = vmatprep.subr.mxu0 0.0
    %184 = vmatpush1.msra.mxu0 0.0
    %185 = vmatprep.subr.mxu0 0.0
    %186 = vmatpush1.msra.mxu0 0.0
    %187 = vmatprep.mubr.f32.mxu0 0.0
    %188 = vmatmul.mubr.f32.gmra.mrb[0].mxu0 %v121
    %v189 = vpop.f32.mrb[0].mxu0
    %v190 = vadd.f32 0.0, %v189
    %v191 = vpop.f32.mrb[0].mxu0
    %192 = vdwg.mxu0
    %v194 = vlaneseq
    %v195 = vshrl.u32 %v194, 7
    %v196 = vsub.s32 0, %v195
    %v197 = vrot.slane %v106, %v196
    %v199 = vadd.f32 %v197, %v190
    %v200 = vld [vmem:[#allocation5] sm:$0x3]
    %vm201 = vcmp.lt.s32.totalorder %v71, %v200
    %v202 = vsel %vm201, %v199, -1e+30
    %vm203 = vcmask 58368
    %v204 = vsel %vm203, %v202, -inf
    %205 = vmax.xlane.f32.xlu0 %v204
    %v206 = vpop.xlane.xlu0 %205
    %v207 = vsub.f32 %v202, %v206
    %v208 = vmul.f32 %v207, 1.442695
    %v209 = vpow.pop %v208
    %v210 = vsel %vm201, %v209, 0.0
    %v211 = vsel %vm203, %v210, 0.0
    %212 = vadd.xlane.f32.xlu0 %v211
    %v213 = vpop.xlane.xlu0 %212
    %v214 = vmax.f32 %v213, 1e-30
    %v215 = vrcp.pop %v214
    %v216 = vmul.f32 %v210, %v215
    %v217 = vcvt.s32.f32 %v200
    %v218 = vmul.f32 %v216, %v217
    %v220 = vlaneseq
    %v221 = vshrl.u32 %v220, 7
    %v222 = vsub.s32 0, %v221
    %v223 = vrot.slane %v218, %v222
    %225 = vbcast.lane.b32.xlu0 %v223, 256
    %v226 = vpop.permute.xlu0 %225
    %v227 = vlaneseq
    %v228 = vshrl.u32 %v227, 7
    %v229 = vsub.s32 1, %v228
    %v230 = vrot.slane %v218, %v229
    %232 = vbcast.lane.b32.xlu0 %v230, 256
    %v233 = vpop.permute.xlu0 %232
    %v236 = vmul.f32 %v100, %v226
    %v237 = vmul.f32 %v101, %v233
    %240 = vset.pattern.permute.xlu0 0
    %241 = vperm.xlu0 %240, %v236
    %v242 = vpop.permute.xlu0 %241
    %243 = vset.pattern.permute.xlu0 0
    %244 = vperm.xlu0 %243, %v237
    %v245 = vpop.permute.xlu0 %244
    %v246 = vlaneseq
    %v247 = vshrl.u32 %v246, 7
    %v248 = vsub.s32 %v71, %v247
    %v249 = vrot.slane %v242, %v248
    %v250 = vlaneseq
    %v251 = vshrl.u32 %v250, 7
    %v252 = vsub.s32 %v71, %v251
    %v253 = vrot.slane %v245, %v252
    %v254 = vsel %vm118, %v253, %v249
    %v256 = vsel %vm201, %v254, 0.0
    %v257 = vsel %vm203, %v256, 0.0
    %258 = vadd.xlane.f32.xlu0 %v257
    %v259 = vpop.xlane.xlu0 %258
    %v260 = vrot.slane %v259, 4
    %v261 = vadd.f32 %v259, %v260
    %v262 = vrot.slane %v261, 2
    %v263 = vadd.f32 %v261, %v262
    %v264 = vrot.slane %v263, 1
    %v265 = vadd.f32 %v263, %v264
    %s266 = vtos %v265
    %v267 = vstv %s266
    %268 = vst [vmem:[#allocation7] sm:$0xff] %v267
    // Predicated region
    $region30: #{tpu_custom_call.1} parent=1 // pred_check
      _
    $region31: #{tpu_custom_call.1} parent=1 // pred_check_branch
      %270 = sbr.rel (0) target = $region33
    $region32: #{tpu_custom_call.1} parent=1 // pred_region
      %s272 = ssub.s32 128, 128
      %273 = vsyncadd [#allocation4], %s272
      %s275 = sshll.u32 [#allocation7], 4
      %s276 = int_to_ptr.vmem [resolvable:$true] %s275
      %278 = dma.vmem_to_hbm [thread:$0]  %s276, 128, %s5, [#allocation4]
    $region33: #{tpu_custom_call.1} parent=1 // pred_fallthru
      _
    // Predicated region
    $region34: #{tpu_custom_call.1} parent=1 // pred_check
      _
    $region35: #{tpu_custom_call.1} parent=1 // pred_check_branch
      %280 = sbr.rel (0) target = $region37
    $region36: #{tpu_custom_call.1} parent=1 // pred_region
      %281 = dma.done [#allocation4], 128
    $region37: #{tpu_custom_call.1} parent=1 // pred_fallthru
      _
    %282 = vsyncpa [#allocation3], 1
    %283 = vsyncpa [#allocation6], 1
    %284 = vsyncpa [#allocation4], 1

</llo_original>
